<compile_context>
chip_gen: v7x
topology: tpu7x:2x2x1
jax: 0.10.0
libtpu: 0.0.40
codegen_flags: <defaults>
</compile_context>

<pallas_src>
import jax
import jax.numpy as jnp
from jax import lax
from jax.experimental import pallas as pl
from jax.experimental.pallas import tpu as pltpu


def _round_up(x, m):
    return (x + m - 1) // m * m


def _conv_stats_kernel(patches_ref, w_ref, y_ref, sum_ref, sq_ref):
    """Pass 1: y = patches @ w (bf16 MXU, f32 acc); store bf16 y; accumulate channel stats."""
    @pl.when(pl.program_id(1) == 0)
    def _():
        sum_ref[...] = jnp.zeros_like(sum_ref)
        sq_ref[...] = jnp.zeros_like(sq_ref)

    y = jnp.dot(patches_ref[...], w_ref[...], preferred_element_type=jnp.float32)
    y_ref[...] = y.astype(y_ref.dtype)

    # Sublane-partial sums (VPU adds only); 8->1 cross-sublane reduce is deferred to the wrapper.
    tm, ocp = y.shape
    y3 = y.reshape(tm // 8, 8, ocp)
    sum_ref[...] += jnp.sum(y3, axis=0)
    sq_ref[...] += jnp.sum(y3 * y3, axis=0)


def _bn_relu_kernel(y_ref, scale_ref, shift_ref, o_ref):
    """Pass 2: folded BN affine + ReLU over a bf16 y tile; lane-dense f32 store."""
    y = y_ref[...].astype(jnp.float32)
    o_ref[...] = jnp.maximum(y * scale_ref[...] + shift_ref[...], 0.0).astype(o_ref.dtype)


def basic_conv2d(x, weight, gamma, beta, *, stride=1, padding=1, eps=1e-3, tm=1024):
    """Conv2d(bias=False) + BatchNorm2d(eps, batch stats) + ReLU.  x: NCHW, weight: (OC,C,KH,KW)."""
    N, C, H, W = x.shape
    OC, Cw, KH, KW = weight.shape
    assert Cw == C
    OH = (H + 2 * padding - KH) // stride + 1
    OW = (W + 2 * padding - KW) // stride + 1
    M = N * OH * OW
    K = C * KH * KW

    # ---- im2col (XLA glue) in bf16: (M, K) with column index = (kh*KW + kw)*C + c ----
    xb = x.astype(jnp.bfloat16)
    xp = jnp.pad(xb, ((0, 0), (0, 0), (padding, padding), (padding, padding)))
    xp = xp.transpose(0, 2, 3, 1)                              # NHWC: (N, Hp, Wp, C)
    cols = [
        xp[:, kh:kh + stride * OH:stride, kw:kw + stride * OW:stride, :]
        for kh in range(KH) for kw in range(KW)
    ]
    patches = jnp.concatenate(cols, axis=-1).reshape(M, K)

    # ---- TPU-friendly padding: OC -> lanes (128), K -> bf16 sublanes (16), M -> tile grid ----
    OCp = _round_up(OC, 128)
    Kp = _round_up(K, 16)
    TM = _round_up(min(tm, M), 16)             # bf16 sublane-aligned tile height (item 11 guard)
    n_tiles = pl.cdiv(M, TM)
    NC = 2 if n_tiles >= 2 else 1              # split the pass-1 reduction over v7x's 2 TCs
    MT = pl.cdiv(n_tiles, NC)                  # M tiles per "core" row of the grid
    Mp = NC * MT * TM

    patches = jnp.pad(patches, ((0, Mp - M), (0, Kp - K)))
    w2d = weight.transpose(2, 3, 1, 0).reshape(K, OC).astype(jnp.bfloat16)
    w2d = jnp.pad(w2d, ((0, Kp - K), (0, OCp - OC)))
    gamma_p = jnp.pad(gamma.astype(jnp.float32), (0, OCp - OC))
    beta_p = jnp.pad(beta.astype(jnp.float32), (0, OCp - OC))

    p_map = lambda c, i: (c * MT + i, 0)

    # ---- pass 1: conv matmul -> bf16 y + per-channel sum / sum-of-squares ----
    y_bf16, ch_sum, ch_sq = pl.pallas_call(
        _conv_stats_kernel,
        out_shape=(
            jax.ShapeDtypeStruct((Mp, OCp), jnp.bfloat16),
            jax.ShapeDtypeStruct((NC * 8, OCp), jnp.float32),
            jax.ShapeDtypeStruct((NC * 8, OCp), jnp.float32),
        ),
        grid=(NC, MT),
        in_specs=[
            pl.BlockSpec((TM, Kp), p_map),
            pl.BlockSpec((Kp, OCp), lambda c, i: (0, 0)),
        ],
        out_specs=[
            pl.BlockSpec((TM, OCp), p_map),
            pl.BlockSpec((8, OCp), lambda c, i: (c, 0)),
            pl.BlockSpec((8, OCp), lambda c, i: (c, 0)),
        ],
        compiler_params=pltpu.CompilerParams(
            dimension_semantics=("parallel", "arbitrary"),
            vmem_limit_bytes=64 * 1024 * 1024,
        ),
        cost_estimate=pl.CostEstimate(
            flops=2 * Mp * Kp * OCp,
            transcendentals=0,
            bytes_accessed=Mp * Kp * 2 + Kp * OCp * 2 + Mp * OCp * 2 + 2 * NC * 8 * OCp * 4,
        ),
    )(patches, w2d)

    # ---- fold training-mode BN (batch stats, biased variance) into scale/shift (tiny XLA op) ----
    # Zero-padded rows/channels contribute 0 to the sums; division uses the true M.
    inv_m = 1.0 / M
    mean = jnp.sum(ch_sum, axis=0) * inv_m                               # (OCp,)
    var = jnp.maximum(jnp.sum(ch_sq, axis=0) * inv_m - mean * mean, 0.0)
    scale = gamma_p * lax.rsqrt(var + eps)
    shift = beta_p - mean * scale
    scale2d = scale.reshape(1, OCp)
    shift2d = shift.reshape(1, OCp)

    # ---- pass 2: affine + ReLU over bf16 y (both TCs via "parallel", lane-dense stores) ----
    TM2 = NC * TM                                 # Mp is a multiple of NC*TM
    out = pl.pallas_call(
        _bn_relu_kernel,
        out_shape=jax.ShapeDtypeStruct((Mp, OCp), jnp.float32),
        grid=(Mp // TM2,),
        in_specs=[
            pl.BlockSpec((TM2, OCp), lambda i: (i, 0)),
            pl.BlockSpec((1, OCp), lambda i: (0, 0)),
            pl.BlockSpec((1, OCp), lambda i: (0, 0)),
        ],
        out_specs=pl.BlockSpec((TM2, OCp), lambda i: (i, 0)),
        compiler_params=pltpu.CompilerParams(
            dimension_semantics=("parallel",),
            vmem_limit_bytes=64 * 1024 * 1024,
        ),
        cost_estimate=pl.CostEstimate(
            flops=3 * Mp * OCp,
            transcendentals=0,
            bytes_accessed=Mp * OCp * 2 + 2 * OCp * 4 + Mp * OCp * 4,
        ),
    )(y_bf16, scale2d, shift2d)

    # slice away padding, back to NCHW for parity with the PyTorch module interface
    out = out[:M, :OC].reshape(N, OH, OW, OC)
    return out.transpose(0, 3, 1, 2)


def _reference(x, weight, gamma, beta, *, stride=1, padding=1, eps=1e-3):
    y = lax.conv_general_dilated(
        x, weight,
        window_strides=(stride, stride),
        padding=((padding, padding), (padding, padding)),
        dimension_numbers=("NCHW", "OIHW", "NCHW"),
        precision=lax.Precision.HIGHEST,
    )
    mean = jnp.mean(y, axis=(0, 2, 3), keepdims=True)
    var = jnp.mean(jnp.square(y - mean), axis=(0, 2, 3), keepdims=True)
    yn = (y - mean) / jnp.sqrt(var + eps)
    z = yn * gamma.reshape(1, -1, 1, 1) + beta.reshape(1, -1, 1, 1)
    return jnp.maximum(z, 0.0)


if __name__ == "__main__":
    # Shapes consistent with the module: BasicConv2d(4, 8, kernel_size=3, padding=1)
    N, C, H, W = 2, 4, 16, 16
    OC, KH, KW = 8, 3, 3

    key = jax.random.PRNGKey(0)
    kx, kwt, kg, kb = jax.random.split(key, 4)
    x = jax.random.normal(kx, (N, C, H, W), dtype=jnp.float32)
    weight = jax.random.normal(kwt, (OC, C, KH, KW), dtype=jnp.float32) * 0.1
    gamma = 1.0 + 0.1 * jax.random.normal(kg, (OC,), dtype=jnp.float32)
    beta = 0.1 * jax.random.normal(kb, (OC,), dtype=jnp.float32)

    # tm=128 so the toy problem (M = 2*16*16 = 512 rows) exercises the multi-tile path:
    # pass-1 grid (2, 2) (two core-rows x two reduction steps), pass-2 grid (2,).
    out = basic_conv2d(x, weight, gamma, beta, stride=1, padding=1, eps=1e-3, tm=128)
    out = jax.block_until_ready(out)

    ref = _reference(x, weight, gamma, beta, stride=1, padding=1, eps=1e-3)
    assert out.shape == (N, OC, H, W), out.shape
    max_err = float(jnp.max(jnp.abs(out - ref)))
    # bf16 MXU inputs + bf16 y intermediate (f32 accumulation / stats) vs HIGHEST f32 reference.
    assert jnp.allclose(out, ref, rtol=2e-2, atol=2e-2), max_err

    print("KERNEL_OK")
</pallas_src>

<mosaic_0001>
module attributes {stable_mosaic.version = 11 : i64} {
  func.func @_conv_stats_kernel(%arg0: i32, %arg1: i32, %arg2: memref<128x48xbf16, #tpu.memory_space<vmem>>, %arg3: memref<48x128xbf16, #tpu.memory_space<vmem>>, %arg4: memref<128x128xbf16, #tpu.memory_space<vmem>>, %arg5: memref<8x128xf32, #tpu.memory_space<vmem>>, %arg6: memref<8x128xf32, #tpu.memory_space<vmem>>) attributes {dimension_semantics = [#tpu.dimension_semantics<parallel>, #tpu.dimension_semantics<arbitrary>], iteration_bounds = array<i64: 2, 2>, scalar_prefetch = 0 : i64, scratch_operands = 0 : i64, tpu.core_type = #tpu.core_type<tc>, window_params = [{transform_indices = @transform_0, window_bounds = array<i64: 128, 48>}, {pipeline_mode = #tpu.pipeline_mode<synchronous>, transform_indices = @transform_1, window_bounds = array<i64: 48, 128>}, {transform_indices = @transform_2, window_bounds = array<i64: 128, 128>}, {transform_indices = @transform_3, window_bounds = array<i64: 8, 128>}, {transform_indices = @transform_4, window_bounds = array<i64: 8, 128>}]} {
    %c0_i32 = arith.constant 0 : i32
    %0 = arith.cmpi eq, %arg1, %c0_i32 : i32
    %1 = arith.extui %0 : i1 to i32
    %c0_i32_0 = arith.constant 0 : i32
    %2 = arith.cmpi ne, %1, %c0_i32_0 : i32
    scf.if %2 {
      %cst_16 = arith.constant 0.000000e+00 : f32
      %18 = vector.broadcast %cst_16 : f32 to vector<8x128xf32>
      %c0_17 = arith.constant 0 : index
      %c0_18 = arith.constant 0 : index
      %19 = vector.load %arg5[%c0_17, %c0_18] : memref<8x128xf32, #tpu.memory_space<vmem>>, vector<8x128xf32>
      tpu.vector_store %arg5[%c0_17, %c0_18], %18 {strides = array<i32>} : memref<8x128xf32, #tpu.memory_space<vmem>>, vector<8x128xf32>,
      %cst_19 = arith.constant 0.000000e+00 : f32
      %20 = vector.broadcast %cst_19 : f32 to vector<8x128xf32>
      %c0_20 = arith.constant 0 : index
      %c0_21 = arith.constant 0 : index
      %21 = vector.load %arg6[%c0_20, %c0_21] : memref<8x128xf32, #tpu.memory_space<vmem>>, vector<8x128xf32>
      tpu.vector_store %arg6[%c0_20, %c0_21], %20 {strides = array<i32>} : memref<8x128xf32, #tpu.memory_space<vmem>>, vector<8x128xf32>,
    } else {
    }
    %c0 = arith.constant 0 : index
    %c0_1 = arith.constant 0 : index
    %3 = vector.load %arg2[%c0, %c0_1] : memref<128x48xbf16, #tpu.memory_space<vmem>>, vector<128x48xbf16>
    %c0_2 = arith.constant 0 : index
    %c0_3 = arith.constant 0 : index
    %4 = vector.load %arg3[%c0_2, %c0_3] : memref<48x128xbf16, #tpu.memory_space<vmem>>, vector<48x128xbf16>
    %cst = arith.constant dense<0.000000e+00> : vector<128x128xf32>
    %5 = tpu.matmul %3, %4, %cst {dimension_numbers = #tpu.dot_dimension_numbers<[1], [0], [0], [1], [0, 0, 1, 1], [], []>} : vector<128x48xbf16>, vector<48x128xbf16>, vector<128x128xf32> -> vector<128x128xf32>
    %6 = arith.truncf %5 : vector<128x128xf32> to vector<128x128xbf16>
    %c0_4 = arith.constant 0 : index
    %c0_5 = arith.constant 0 : index
    %7 = vector.load %arg4[%c0_4, %c0_5] : memref<128x128xbf16, #tpu.memory_space<vmem>>, vector<128x128xbf16>
    tpu.vector_store %arg4[%c0_4, %c0_5], %6 {strides = array<i32>} : memref<128x128xbf16, #tpu.memory_space<vmem>>, vector<128x128xbf16>,
    %8 = vector.shape_cast %5 : vector<128x128xf32> to vector<16x8x128xf32>
    %c0_6 = arith.constant 0 : index
    %c0_7 = arith.constant 0 : index
    %9 = vector.load %arg5[%c0_6, %c0_7] : memref<8x128xf32, #tpu.memory_space<vmem>>, vector<8x128xf32>
    %cst_8 = arith.constant dense<0.000000e+00> : vector<8x128xf32>
    %10 = vector.multi_reduction <add>, %8, %cst_8 [0] : vector<16x8x128xf32> to vector<8x128xf32>
    %11 = arith.addf %9, %10 : vector<8x128xf32>
    %c0_9 = arith.constant 0 : index
    %c0_10 = arith.constant 0 : index
    %12 = vector.load %arg5[%c0_9, %c0_10] : memref<8x128xf32, #tpu.memory_space<vmem>>, vector<8x128xf32>
    tpu.vector_store %arg5[%c0_9, %c0_10], %11 {strides = array<i32>} : memref<8x128xf32, #tpu.memory_space<vmem>>, vector<8x128xf32>,
    %c0_11 = arith.constant 0 : index
    %c0_12 = arith.constant 0 : index
    %13 = vector.load %arg6[%c0_11, %c0_12] : memref<8x128xf32, #tpu.memory_space<vmem>>, vector<8x128xf32>
    %14 = arith.mulf %8, %8 : vector<16x8x128xf32>
    %cst_13 = arith.constant dense<0.000000e+00> : vector<8x128xf32>
    %15 = vector.multi_reduction <add>, %14, %cst_13 [0] : vector<16x8x128xf32> to vector<8x128xf32>
    %16 = arith.addf %13, %15 : vector<8x128xf32>
    %c0_14 = arith.constant 0 : index
    %c0_15 = arith.constant 0 : index
    %17 = vector.load %arg6[%c0_14, %c0_15] : memref<8x128xf32, #tpu.memory_space<vmem>>, vector<8x128xf32>
    tpu.vector_store %arg6[%c0_14, %c0_15], %16 {strides = array<i32>} : memref<8x128xf32, #tpu.memory_space<vmem>>, vector<8x128xf32>,
    return
  }
  func.func @transform_0(%arg0: i32, %arg1: i32) -> (i32, i32) {
    %c2_i32 = arith.constant 2 : i32
    %0 = arith.muli %arg0, %c2_i32 : i32
    %1 = arith.addi %0, %arg1 : i32
    %c0_i32 = arith.constant 0 : i32
    %c0_i32_0 = arith.constant 0 : i32
    return %1, %c0_i32 : i32, i32
  }
  func.func @transform_1(%arg0: i32, %arg1: i32) -> (i32, i32) {
    %c0_i32 = arith.constant 0 : i32
    %c0_i32_0 = arith.constant 0 : i32
    %c0_i32_1 = arith.constant 0 : i32
    return %c0_i32, %c0_i32_0 : i32, i32
  }
  func.func @transform_2(%arg0: i32, %arg1: i32) -> (i32, i32) {
    %c2_i32 = arith.constant 2 : i32
    %0 = arith.muli %arg0, %c2_i32 : i32
    %1 = arith.addi %0, %arg1 : i32
    %c0_i32 = arith.constant 0 : i32
    %c0_i32_0 = arith.constant 0 : i32
    return %1, %c0_i32 : i32, i32
  }
  func.func @transform_3(%arg0: i32, %arg1: i32) -> (i32, i32) {
    %c0_i32 = arith.constant 0 : i32
    %c0_i32_0 = arith.constant 0 : i32
    return %arg0, %c0_i32 : i32, i32
  }
  func.func @transform_4(%arg0: i32, %arg1: i32) -> (i32, i32) {
    %c0_i32 = arith.constant 0 : i32
    %c0_i32_0 = arith.constant 0 : i32
    return %arg0, %c0_i32 : i32, i32
  }
}

</mosaic_0001>

<llo_original>
// kernel: tpu_custom_call.1
$region0: #{tpu_custom_call.1}
  #allocation0 [shape = 'u32[]', space=smem, size = 0x4, offset = 0x4, fixed_abs, tag = 'smem constant byte address 0x4 - core index']
  #allocation1 [shape = 'u32[144,128]{1,0:T(1,128)}', space=vmem, size = 0x12000, scoped, tag = 'internal scratch']
  %s0 = inlined_call_operand.hbm [shape: bf16[512,48], index: 0, kind: input, shape index: {}]
  %s1 = inlined_call_operand.hbm [shape: bf16[48,128], index: 1, kind: input, shape index: {}]
  %s2 = inlined_call_operand.hbm [shape: bf16[512,128], index: 2, kind: output, shape index: {0}]
  %s3 = inlined_call_operand.hbm [shape: f32[16,128], index: 3, kind: output, shape index: {1}]
  %s4 = inlined_call_operand.hbm [shape: f32[16,128], index: 4, kind: output, shape index: {2}]
  %5 = xla_tuple %s2, %s3, %s4
  %s6 = sld [smem:[#allocation0]]
  $region69: #{tpu_custom_call.1} parent=0
    _
  %s8 = ssub.s32 1, %s6
  %s9 = scalar_select 0, %s8, %s6
  $region1: #{tpu_custom_call.1} parent=0
    #allocation2 [shape = 'u8[65536]{0}', space=vmem, size = 0x10000, scoped, tag = 'input window, operand 0']
    #allocation3 [shape = 's32[2]{0}', space=sflag, size = 0x8, scoped, tag = 'scoped memory for tpu_custom_call.1']
    #allocation4 [shape = 's32[2]{0}', space=sflag, size = 0x8, scoped, tag = 'scoped memory for tpu_custom_call.1']
    #allocation5 [shape = 'u8[12288]{0}', space=vmem, size = 0x3000, scoped, tag = 'input window, operand 1, single buffered']
    #allocation6 [shape = 's32[1]{0}', space=sflag, size = 0x4, scoped, tag = 'scoped memory for tpu_custom_call.1']
    #allocation7 [shape = 'u8[65536]{0}', space=vmem, size = 0x10000, scoped, tag = 'output window, operand 0']
    #allocation8 [shape = 'u8[8192]{0}', space=vmem, size = 0x2000, scoped, tag = 'output window, operand 1']
    #allocation9 [shape = 's32[2]{0}', space=sflag, size = 0x8, scoped, tag = 'scoped memory for tpu_custom_call.1']
    #allocation10 [shape = 'u8[8192]{0}', space=vmem, size = 0x2000, scoped, tag = 'output window, operand 2']
    %10 = vsyncpa [#allocation3], 0
    %s11 = scalar_lea.sflag [#allocation3], 1
    %12 = vsyncpa %s11, 0
    %13 = vsyncpa [#allocation6], 0
    %14 = vsyncpa [#allocation4], 0
    %s15 = scalar_lea.sflag [#allocation4], 1
    %16 = vsyncpa %s15, 0
    %17 = vsyncpa [#allocation9], 0
    %s18 = scalar_lea.sflag [#allocation9], 1
    %19 = vsyncpa %s18, 0
    loop: start=0, step=1, limit=6
    $region2: #{tpu_custom_call.1} parent=1 // loop_pre_header
      _
    $region3: #{tpu_custom_call.1} parent=1 // loop_header
      %s21 = sphi 0, %s25
      %p22 = scmp.ge.s32.totalorder %s21, 6
      %s28 = sphi 0, %s40
      %s29 = sphi 0, %s36
      %s30 = sphi 0, %s28
      %s31 = sphi 0, %s29
      %s32 = sphi 0, %s30
      %s33 = sphi 0, %s31
      %s47 = sphi 0, %s49
      %s50 = sphi 0, %s47
      %s51 = sphi 0, %s50
      %s67 = sphi 0, %s51
      %s71 = sphi 0, %s71
      %s73 = sphi 0, %s71
      %s74 = sphi 0, %s73
      %s88 = sphi 0, %s74
      %s98 = sphi 0, %s100
      %s101 = sphi 0, %s98
      %s102 = sphi 0, %s101
      %s118 = sphi 0, %s102
      %s124 = sphi 0, %s126
      %s127 = sphi 0, %s124
      %s128 = sphi 0, %s127
      %s144 = sphi 0, %s128
      %s150 = sphi 0, %s152
      %s153 = sphi 0, %s150
      %s154 = sphi 0, %s153
      %s170 = sphi 0, %s154
    $region4: #{tpu_custom_call.1} parent=1 // loop_header_branch
      %24 = sbr.rel (%p22) target = $region8
    $region5: #{tpu_custom_call.1} parent=1 // loop_body
      %s26 = ssub.s32 %s21, 1
      %s27 = ssub.s32 %s21, 2
      %s34 = sadd.s32 1, %s29
      %p35 = scmp.ge.s32.totalorder %s34, 2
      %s36 = scalar_select %p35, 0, %s34
      %s37 = sadd.s32 1, %s28
      %s38 = scalar_select %p35, %s37, %s28
      %p39 = scmp.ge.s32.totalorder %s38, 2
      %s40 = scalar_select %p39, 0, %s38
      %s41 = smul.u32 %s28, 2
      %s42 = sadd.s32 %s41, %s29
      %s43 = smul.u32 %s40, 2
      %s44 = sadd.s32 %s43, %s36
      %s45 = ssub.s32 %s42, %s44
      %p46 = scmp.eq.s32.totalorder %s45, 0
      %s48 = sadd.s32 %s47, 1
      %s49 = scalar_select %p46, %s47, %s48
      %p52 = pneg %p46
      %p53 = scmp.eq.s32.totalorder %s21, 3
      %p54 = por %p52, %p53
      %p55 = scmp.ne.s32.totalorder %s47, %s50
      %p56 = scmp.eq.s32.totalorder %s21, 0
      %p57 = por %p55, %p56
      %p58 = scmp.ne.s32.totalorder %s47, %s50
      %p59 = scmp.eq.s32.totalorder %s26, 3
      %p60 = por %p58, %p59
      %p61 = scmp.ne.s32.totalorder %s50, %s51
      %p62 = scmp.eq.s32.totalorder %s26, 0
      %p63 = por %p61, %p62
      %p64 = scmp.ne.s32.totalorder %s50, %s51
      %p65 = scmp.eq.s32.totalorder %s27, 3
      %p66 = por %p64, %p65
      %p68 = scmp.ne.s32.totalorder %s51, %s67
      %p69 = scmp.eq.s32.totalorder %s27, 0
      %p70 = por %p68, %p69
      %s72 = sadd.s32 %s71, 1
      %p75 = scmp.eq.s32.totalorder %s21, 3
      %p76 = scmp.ne.s32.totalorder %s71, %s73
      %p77 = scmp.eq.s32.totalorder %s21, 0
      %p78 = por %p76, %p77
      %p79 = scmp.ne.s32.totalorder %s71, %s73
      %p80 = scmp.eq.s32.totalorder %s26, 3
      %p81 = por %p79, %p80
      %p82 = scmp.ne.s32.totalorder %s73, %s74
      %p83 = scmp.eq.s32.totalorder %s26, 0
      %p84 = por %p82, %p83
      %p85 = scmp.ne.s32.totalorder %s73, %s74
      %p86 = scmp.eq.s32.totalorder %s27, 3
      %p87 = por %p85, %p86
      %p89 = scmp.ne.s32.totalorder %s74, %s88
      %p90 = scmp.eq.s32.totalorder %s27, 0
      %p91 = por %p89, %p90
      %s92 = smul.u32 %s28, 2
      %s93 = sadd.s32 %s92, %s29
      %s94 = smul.u32 %s40, 2
      %s95 = sadd.s32 %s94, %s36
      %s96 = ssub.s32 %s93, %s95
      %p97 = scmp.eq.s32.totalorder %s96, 0
      %s99 = sadd.s32 %s98, 1
      %s100 = scalar_select %p97, %s98, %s99
      %p103 = pneg %p97
      %p104 = scmp.eq.s32.totalorder %s21, 3
      %p105 = por %p103, %p104
      %p106 = scmp.ne.s32.totalorder %s98, %s101
      %p107 = scmp.eq.s32.totalorder %s21, 0
      %p108 = por %p106, %p107
      %p109 = scmp.ne.s32.totalorder %s98, %s101
      %p110 = scmp.eq.s32.totalorder %s26, 3
      %p111 = por %p109, %p110
      %p112 = scmp.ne.s32.totalorder %s101, %s102
      %p113 = scmp.eq.s32.totalorder %s26, 0
      %p114 = por %p112, %p113
      %p115 = scmp.ne.s32.totalorder %s101, %s102
      %p116 = scmp.eq.s32.totalorder %s27, 3
      %p117 = por %p115, %p116
      %p119 = scmp.ne.s32.totalorder %s102, %s118
      %p120 = scmp.eq.s32.totalorder %s27, 0
      %p121 = por %p119, %p120
      %s122 = ssub.s32 %s28, %s40
      %p123 = scmp.eq.s32.totalorder %s122, 0
      %s125 = sadd.s32 %s124, 1
      %s126 = scalar_select %p123, %s124, %s125
      %p129 = pneg %p123
      %p130 = scmp.eq.s32.totalorder %s21, 3
      %p131 = por %p129, %p130
      %p132 = scmp.ne.s32.totalorder %s124, %s127
      %p133 = scmp.eq.s32.totalorder %s21, 0
      %p134 = por %p132, %p133
      %p135 = scmp.ne.s32.totalorder %s124, %s127
      %p136 = scmp.eq.s32.totalorder %s26, 3
      %p137 = por %p135, %p136
      %p138 = scmp.ne.s32.totalorder %s127, %s128
      %p139 = scmp.eq.s32.totalorder %s26, 0
      %p140 = por %p138, %p139
      %p141 = scmp.ne.s32.totalorder %s127, %s128
      %p142 = scmp.eq.s32.totalorder %s27, 3
      %p143 = por %p141, %p142
      %p145 = scmp.ne.s32.totalorder %s128, %s144
      %p146 = scmp.eq.s32.totalorder %s27, 0
      %p147 = por %p145, %p146
      %s148 = ssub.s32 %s28, %s40
      %p149 = scmp.eq.s32.totalorder %s148, 0
      %s151 = sadd.s32 %s150, 1
      %s152 = scalar_select %p149, %s150, %s151
      %p155 = pneg %p149
      %p156 = scmp.eq.s32.totalorder %s21, 3
      %p157 = por %p155, %p156
      %p158 = scmp.ne.s32.totalorder %s150, %s153
      %p159 = scmp.eq.s32.totalorder %s21, 0
      %p160 = por %p158, %p159
      %p161 = scmp.ne.s32.totalorder %s150, %s153
      %p162 = scmp.eq.s32.totalorder %s26, 3
      %p163 = por %p161, %p162
      %p164 = scmp.ne.s32.totalorder %s153, %s154
      %p165 = scmp.eq.s32.totalorder %s26, 0
      %p166 = por %p164, %p165
      %p167 = scmp.ne.s32.totalorder %s153, %s154
      %p168 = scmp.eq.s32.totalorder %s27, 3
      %p169 = por %p167, %p168
      %p171 = scmp.ne.s32.totalorder %s154, %s170
      %p172 = scmp.eq.s32.totalorder %s27, 0
      %p173 = por %p171, %p172
      %p174 = scmp.le.s32.totalorder 1, %s21
      %p175 = scmp.lt.s32.totalorder %s21, 5
      %p176 = pnand %p174, %p175
      %p177 = pneg %p176
      // Predicated region
      $region9: #{tpu_custom_call.1} parent=5 // pred_check
        _
      $region10: #{tpu_custom_call.1} parent=5 // pred_check_branch
        %179 = sbr.rel (%p176) target = $region12
      $region11: #{tpu_custom_call.1} parent=5 // pred_region
        %s180 = ssub.s32 %s21, 1
        // Predicated region
        $region13: #{tpu_custom_call.1} parent=11 // pred_check
          %p181 = pneg %p84
        $region14: #{tpu_custom_call.1} parent=11 // pred_check_branch
          %183 = sbr.rel (%p181) target = $region16
        $region15: #{tpu_custom_call.1} parent=11 // pred_region
          %s185 = ssub.s32 384, 384
          %186 = vsyncadd [#allocation6], %s185
          %s187 = sshll.u32 [#allocation5], 4
          %s188 = int_to_ptr.vmem [resolvable:$true] %s187
          %193 = dma.hbm_to_vmem [thread:$0]  %s1, 384, %s188, [#allocation6], 64, 64, 4
        $region16: #{tpu_custom_call.1} parent=11 // pred_fallthru
          _
      $region12: #{tpu_custom_call.1} parent=5 // pred_fallthru
        _
      %p194 = scmp.lt.s32.totalorder %s21, 4
      // Predicated region
      $region17: #{tpu_custom_call.1} parent=5 // pred_check
        %p195 = pneg %p194
      $region18: #{tpu_custom_call.1} parent=5 // pred_check_branch
        %197 = sbr.rel (%p195) target = $region20
      $region19: #{tpu_custom_call.1} parent=5 // pred_region
        // Predicated region
        $region21: #{tpu_custom_call.1} parent=19 // pred_check
          %p198 = pneg %p57
        $region22: #{tpu_custom_call.1} parent=19 // pred_check_branch
          %200 = sbr.rel (%p198) target = $region24
        $region23: #{tpu_custom_call.1} parent=19 // pred_region
          %s201 = sand.u32 %s47, 1
          %s202 = scalar_lea.sflag [#allocation3], %s201
          %s203 = sand.u32 %s47, 1
          %s204 = smul.addr %s203, 64
          %s205 = scalar_lea.vmem [#allocation2], %s204
          %s206 = smul.u32 %s28, 2
          %s207 = sadd.s32 %s206, %s29
          %s208 = smul.u32 16, %s207
          %s210 = ssub.s32 1024, 1024
          %211 = vsyncadd %s202, %s210
          %s212 = smul.addr %s208, 64
          %s213 = scalar_lea.hbm %s0, %s212
          %s214 = sshll.u32 %s205, 4
          %s215 = int_to_ptr.vmem [resolvable:$true] %s214
          %220 = dma.hbm_to_vmem [thread:$0]  %s213, 1024, %s215, %s202, 64, 64, 4
        $region24: #{tpu_custom_call.1} parent=19 // pred_fallthru
          _
      $region20: #{tpu_custom_call.1} parent=5 // pred_fallthru
        _
      %p221 = scmp.le.s32.totalorder 1, %s21
      %p222 = scmp.lt.s32.totalorder %s21, 5
      %p223 = pnand %p221, %p222
      %p224 = pneg %p223
      // Predicated region
      $region25: #{tpu_custom_call.1} parent=5 // pred_check
        _
      $region26: #{tpu_custom_call.1} parent=5 // pred_check_branch
        %226 = sbr.rel (%p223) target = $region28
      $region27: #{tpu_custom_call.1} parent=5 // pred_region
        %s227 = ssub.s32 %s21, 1
        %s228 = sand.u32 %s50, 1
        %s229 = scalar_lea.sflag [#allocation3], %s228
        %s230 = sand.u32 %s50, 1
        %s231 = smul.addr %s230, 64
        %s232 = scalar_lea.vmem [#allocation2], %s231
        // Predicated region
        $region29: #{tpu_custom_call.1} parent=27 // pred_check
          %p233 = pneg %p63
        $region30: #{tpu_custom_call.1} parent=27 // pred_check_branch
          %235 = sbr.rel (%p233) target = $region32
        $region31: #{tpu_custom_call.1} parent=27 // pred_region
          %236 = dma.done %s229, 1024
        $region32: #{tpu_custom_call.1} parent=27 // pred_fallthru
          _
        // Predicated region
        $region33: #{tpu_custom_call.1} parent=27 // pred_check
          %p237 = pneg %p84
        $region34: #{tpu_custom_call.1} parent=27 // pred_check_branch
          %239 = sbr.rel (%p237) target = $region36
        $region35: #{tpu_custom_call.1} parent=27 // pred_region
          %240 = dma.done [#allocation6], 384
        $region36: #{tpu_custom_call.1} parent=27 // pred_fallthru
          _
        %s241 = sand.u32 %s50, 1
        %s242 = scalar_lea.sflag [#allocation3], %s241
        %s243 = sand.u32 %s50, 1
        %s244 = smul.addr %s243, 64
        %s245 = scalar_lea.vmem [#allocation2], %s244
        %p246 = pneg %p63
        %p247 = pneg %p60
        %p248 = pneg %p84
        %p249 = pneg %p81
        %p250 = pneg %p114
        %p251 = pneg %p111
        %s252 = sand.u32 %s101, 1
        %s253 = scalar_lea.sflag [#allocation4], %s252
        %s254 = sand.u32 %s101, 1
        %s255 = smul.addr %s254, 64
        %s256 = scalar_lea.vmem [#allocation7], %s255
        %p257 = pneg %p140
        %p258 = pneg %p137
        %s259 = sand.u32 %s26, 1
        %s260 = scalar_lea.sflag [#allocation9], %s259
        %s261 = sand.u32 %s127, 1
        %s262 = smul.addr %s261, 8
        %s263 = scalar_lea.vmem [#allocation8], %s262
        %p264 = pneg %p166
        %p265 = pneg %p163
        %s266 = sand.u32 %s26, 1
        %s267 = scalar_lea.sflag [#allocation9], %s266
        %s268 = sand.u32 %s153, 1
        %s269 = smul.addr %s268, 8
        %s270 = scalar_lea.vmem [#allocation10], %s269
        %s271 = smul.u32 %s30, 2
        %s272 = sadd.s32 %s271, %s31
        %s273 = smul.u32 16, %s272
        %s274 = smul.u32 %s30, 2
        %s275 = sadd.s32 %s274, %s31
        %s276 = smul.u32 16, %s275
        %p278 = scmp.eq.s32.totalorder %s31, 0
        // Predicated region
        $region37: #{tpu_custom_call.1} parent=27 // pred_check
          %p279 = pneg %p278
        $region38: #{tpu_custom_call.1} parent=27 // pred_check_branch
          %281 = sbr.rel (%p279) target = $region40
        $region39: #{tpu_custom_call.1} parent=27 // pred_region
          %282 = vst [vmem:[%s263] sm:$0xff] 0.0
          %283 = vst [vmem:[%s270] sm:$0xff] 0.0
        $region40: #{tpu_custom_call.1} parent=27 // pred_fallthru
          _
        %v284 = vld [vmem:[%s232] sm:$0xf]
        %v285 = vld [vmem:[%s232 + $0x4] sm:$0xf]
        %v286 = vld [vmem:[%s232 + $0x8] sm:$0xf]
        %v287 = vld [vmem:[%s232 + $0xc] sm:$0xf]
        %v288 = vld [vmem:[%s232 + $0x10] sm:$0xf]
        %v289 = vld [vmem:[%s232 + $0x14] sm:$0xf]
        %v290 = vld [vmem:[%s232 + $0x18] sm:$0xf]
        %v291 = vld [vmem:[%s232 + $0x1c] sm:$0xf]
        %v292 = vld [vmem:[%s232 + $0x20] sm:$0xf]
        %v293 = vld [vmem:[%s232 + $0x24] sm:$0xf]
        %v294 = vld [vmem:[%s232 + $0x28] sm:$0xf]
        %v295 = vld [vmem:[%s232 + $0x2c] sm:$0xf]
        %v296 = vld [vmem:[%s232 + $0x30] sm:$0xf]
        %v297 = vld [vmem:[%s232 + $0x34] sm:$0xf]
        %v298 = vld [vmem:[%s232 + $0x38] sm:$0xf]
        %v299 = vld [vmem:[%s232 + $0x3c] sm:$0xf]
        %v300 = vld [vmem:[#allocation5] sm:$0xf]
        %v301 = vld [vmem:[#allocation5 + $0x4] sm:$0xf]
        %v302 = vld [vmem:[#allocation5 + $0x8] sm:$0xf]
        %v303 = vld [vmem:[#allocation5 + $0xc] sm:$0xf]
        %v304 = vld [vmem:[#allocation5 + $0x10] sm:$0xf]
        %v305 = vld [vmem:[#allocation5 + $0x14] sm:$0xf]
        %v322 = vunpack.c.l.b16 %v284
        %v323 = vunpack.c.l.b16 %v285
        %v324 = vunpack.c.l.b16 %v286
        %v325 = vunpack.c.l.b16 %v287
        %v326 = vunpack.c.l.b16 %v288
        %v327 = vunpack.c.l.b16 %v289
        %v328 = vunpack.c.l.b16 %v290
        %v329 = vunpack.c.l.b16 %v291
        %v330 = vunpack.c.l.b16 %v292
        %v331 = vunpack.c.l.b16 %v293
        %v332 = vunpack.c.l.b16 %v294
        %v333 = vunpack.c.l.b16 %v295
        %v334 = vunpack.c.l.b16 %v296
        %v335 = vunpack.c.l.b16 %v297
        %v336 = vunpack.c.l.b16 %v298
        %v337 = vunpack.c.l.b16 %v299
        %v338 = vpack.c.b16 %v323, %v322
        %v339 = vpack.c.b16 %v325, %v324
        %v340 = vpack.c.b16 %v327, %v326
        %v341 = vpack.c.b16 %v329, %v328
        %v342 = vpack.c.b16 %v331, %v330
        %v343 = vpack.c.b16 %v333, %v332
        %v344 = vpack.c.b16 %v335, %v334
        %v345 = vpack.c.b16 %v337, %v336
        %v352 = vunpack.c.l.b16 %v300
        %v353 = vunpack.c.l.b16 %v301
        %v354 = vunpack.c.l.b16 %v302
        %v355 = vunpack.c.l.b16 %v303
        %v356 = vunpack.c.l.b16 %v304
        %v357 = vunpack.c.l.b16 %v305
        %v358 = vpack.c.b16 %v353, %v352
        %v359 = vpack.c.b16 %v355, %v354
        %v360 = vpack.c.b16 %v357, %v356
        %vm364 = vcmask 392192
        %v366 = vsel %vm364, %v338, 0
        %v369 = vsel %vm364, %v339, 0
        %v372 = vsel %vm364, %v340, 0
        %v375 = vsel %vm364, %v341, 0
        %v378 = vsel %vm364, %v342, 0
        %v381 = vsel %vm364, %v343, 0
        %v384 = vsel %vm364, %v344, 0
        %v387 = vsel %vm364, %v345, 0
        %389 = vmatprep.subr.bf16.mxu0 0
        %390 = vmatpush1.bf16.msra.mxu0 %v358
        %391 = vmatprep.subr.bf16.mxu0 0
        %392 = vmatpush1.bf16.msra.mxu0 %v359
        %393 = vmatprep.subr.bf16.mxu0 0
        %394 = vmatpush1.bf16.msra.mxu0 %v360
        %395 = vmatprep.subr.bf16.mxu0 0
        %396 = vmatpush1.bf16.msra.mxu0 0
        %397 = vmatprep.subr.bf16.mxu0 0
        %398 = vmatpush1.bf16.msra.mxu0 0
        %399 = vmatprep.subr.bf16.mxu0 0
        %400 = vmatpush1.bf16.msra.mxu0 0
        %401 = vmatprep.subr.bf16.mxu0 0
        %402 = vmatpush1.bf16.msra.mxu0 0
        %403 = vmatprep.subr.bf16.mxu0 0
        %404 = vmatpush1.bf16.msra.mxu0 0
        %405 = vmatprep.subr.bf16.mxu0 0
        %406 = vmatpush1.bf16.msra.mxu0 0
        %407 = vmatprep.subr.bf16.mxu0 0
        %408 = vmatpush1.bf16.msra.mxu0 0
        %409 = vmatprep.subr.bf16.mxu0 0
        %410 = vmatpush1.bf16.msra.mxu0 0
        %411 = vmatprep.subr.bf16.mxu0 0
        %412 = vmatpush1.bf16.msra.mxu0 0
        %413 = vmatprep.subr.bf16.mxu0 0
        %414 = vmatpush1.bf16.msra.mxu0 0
        %415 = vmatprep.subr.bf16.mxu0 0
        %416 = vmatpush1.bf16.msra.mxu0 0
        %417 = vmatprep.subr.bf16.mxu0 0
        %418 = vmatpush1.bf16.msra.mxu0 0
        %419 = vmatprep.subr.bf16.mxu0 0
        %420 = vmatpush1.bf16.msra.mxu0 0
        %421 = vmatprep.mubr.bf16.mxu0 0
        %422 = vmatmul.mubr.bf16.gmra.mrb[0].mxu0 %v366
        %v423 = vpop.f32.mrb[0].mxu0
        %v424 = vadd.f32 0.0, %v423
        %v425 = vpop.f32.mrb[0].mxu0
        %v426 = vpop.f32.mrb[0].mxu0
        %v427 = vadd.f32 0.0, %v426
        %v428 = vpop.f32.mrb[0].mxu0
        %429 = vmatprep.mubr.bf16.mxu0 0
        %430 = vmatmul.mubr.bf16.gmra.mrb[0].mxu0 %v369
        %v431 = vpop.f32.mrb[0].mxu0
        %v432 = vadd.f32 0.0, %v431
        %v433 = vpop.f32.mrb[0].mxu0
        %v434 = vpop.f32.mrb[0].mxu0
        %v435 = vadd.f32 0.0, %v434
        %v436 = vpop.f32.mrb[0].mxu0
        %437 = vmatprep.mubr.bf16.mxu0 0
        %438 = vmatmul.mubr.bf16.gmra.mrb[0].mxu0 %v372
        %v439 = vpop.f32.mrb[0].mxu0
        %v440 = vadd.f32 0.0, %v439
        %v441 = vpop.f32.mrb[0].mxu0
        %v442 = vpop.f32.mrb[0].mxu0
        %v443 = vadd.f32 0.0, %v442
        %v444 = vpop.f32.mrb[0].mxu0
        %445 = vmatprep.mubr.bf16.mxu0 0
        %446 = vmatmul.mubr.bf16.gmra.mrb[0].mxu0 %v375
        %v447 = vpop.f32.mrb[0].mxu0
        %v448 = vadd.f32 0.0, %v447
        %v449 = vpop.f32.mrb[0].mxu0
        %v450 = vpop.f32.mrb[0].mxu0
        %v451 = vadd.f32 0.0, %v450
        %v452 = vpop.f32.mrb[0].mxu0
        %453 = vmatprep.mubr.bf16.mxu0 0
        %454 = vmatmul.mubr.bf16.gmra.mrb[0].mxu0 %v378
        %v455 = vpop.f32.mrb[0].mxu0
        %v456 = vadd.f32 0.0, %v455
        %v457 = vpop.f32.mrb[0].mxu0
        %v458 = vpop.f32.mrb[0].mxu0
        %v459 = vadd.f32 0.0, %v458
        %v460 = vpop.f32.mrb[0].mxu0
        %461 = vmatprep.mubr.bf16.mxu0 0
        %462 = vmatmul.mubr.bf16.gmra.mrb[0].mxu0 %v381
        %v463 = vpop.f32.mrb[0].mxu0
        %v464 = vadd.f32 0.0, %v463
        %v465 = vpop.f32.mrb[0].mxu0
        %v466 = vpop.f32.mrb[0].mxu0
        %v467 = vadd.f32 0.0, %v466
        %v468 = vpop.f32.mrb[0].mxu0
        %469 = vmatprep.mubr.bf16.mxu0 0
        %470 = vmatmul.mubr.bf16.gmra.mrb[0].mxu0 %v384
        %v471 = vpop.f32.mrb[0].mxu0
        %v472 = vadd.f32 0.0, %v471
        %v473 = vpop.f32.mrb[0].mxu0
        %v474 = vpop.f32.mrb[0].mxu0
        %v475 = vadd.f32 0.0, %v474
        %v476 = vpop.f32.mrb[0].mxu0
        %477 = vmatprep.mubr.bf16.mxu0 0
        %478 = vmatmul.mubr.bf16.gmra.mrb[0].mxu0 %v387
        %v479 = vpop.f32.mrb[0].mxu0
        %v480 = vadd.f32 0.0, %v479
        %v481 = vpop.f32.mrb[0].mxu0
        %v482 = vpop.f32.mrb[0].mxu0
        %v483 = vadd.f32 0.0, %v482
        %v484 = vpop.f32.mrb[0].mxu0
        %485 = vdwg.mxu0
        %v486 = vpack.c.bf16 %v427, %v424
        %v487 = vpack.c.bf16 %v435, %v432
        %v488 = vpack.c.bf16 %v443, %v440
        %v489 = vpack.c.bf16 %v451, %v448
        %v490 = vpack.c.bf16 %v459, %v456
        %v491 = vpack.c.bf16 %v467, %v464
        %v492 = vpack.c.bf16 %v475, %v472
        %v493 = vpack.c.bf16 %v483, %v480
        %v502 = vunpack.c.l.b16 %v486
        %v503 = vunpack.c.h.b16 %v486
        %v504 = vunpack.c.l.b16 %v487
        %v505 = vunpack.c.h.b16 %v487
        %v506 = vunpack.c.l.b16 %v488
        %v507 = vunpack.c.h.b16 %v488
        %v508 = vunpack.c.l.b16 %v489
        %v509 = vunpack.c.h.b16 %v489
        %v510 = vunpack.c.l.b16 %v490
        %v511 = vunpack.c.h.b16 %v490
        %v512 = vunpack.c.l.b16 %v491
        %v513 = vunpack.c.h.b16 %v491
        %v514 = vunpack.c.l.b16 %v492
        %v515 = vunpack.c.h.b16 %v492
        %v516 = vunpack.c.l.b16 %v493
        %v517 = vunpack.c.h.b16 %v493
        %v518 = vpack.c.b16 %v502, %v502
        %v519 = vpack.c.b16 %v503, %v503
        %v520 = vpack.c.b16 %v504, %v504
        %v521 = vpack.c.b16 %v505, %v505
        %v522 = vpack.c.b16 %v506, %v506
        %v523 = vpack.c.b16 %v507, %v507
        %v524 = vpack.c.b16 %v508, %v508
        %v525 = vpack.c.b16 %v509, %v509
        %v526 = vpack.c.b16 %v510, %v510
        %v527 = vpack.c.b16 %v511, %v511
        %v528 = vpack.c.b16 %v512, %v512
        %v529 = vpack.c.b16 %v513, %v513
        %v530 = vpack.c.b16 %v514, %v514
        %v531 = vpack.c.b16 %v515, %v515
        %v532 = vpack.c.b16 %v516, %v516
        %v533 = vpack.c.b16 %v517, %v517
        %550 = vst [vmem:[%s256] sm:$0xf] %v518
        %551 = vst [vmem:[%s256 + $0x4] sm:$0xf] %v519
        %552 = vst [vmem:[%s256 + $0x8] sm:$0xf] %v520
        %553 = vst [vmem:[%s256 + $0xc] sm:$0xf] %v521
        %554 = vst [vmem:[%s256 + $0x10] sm:$0xf] %v522
        %555 = vst [vmem:[%s256 + $0x14] sm:$0xf] %v523
        %556 = vst [vmem:[%s256 + $0x18] sm:$0xf] %v524
        %557 = vst [vmem:[%s256 + $0x1c] sm:$0xf] %v525
        %558 = vst [vmem:[%s256 + $0x20] sm:$0xf] %v526
        %559 = vst [vmem:[%s256 + $0x24] sm:$0xf] %v527
        %560 = vst [vmem:[%s256 + $0x28] sm:$0xf] %v528
        %561 = vst [vmem:[%s256 + $0x2c] sm:$0xf] %v529
        %562 = vst [vmem:[%s256 + $0x30] sm:$0xf] %v530
        %563 = vst [vmem:[%s256 + $0x34] sm:$0xf] %v531
        %564 = vst [vmem:[%s256 + $0x38] sm:$0xf] %v532
        %565 = vst [vmem:[%s256 + $0x3c] sm:$0xf] %v533
        %v566 = vld [vmem:[%s263] sm:$0xff]
        %v567 = vadd.f32 %v424, %v427
        %v568 = vadd.f32 %v567, %v432
        %v569 = vadd.f32 %v568, %v435
        %v570 = vadd.f32 %v569, %v440
        %v571 = vadd.f32 %v570, %v443
        %v572 = vadd.f32 %v571, %v448
        %v573 = vadd.f32 %v572, %v451
        %v574 = vadd.f32 %v573, %v456
        %v575 = vadd.f32 %v574, %v459
        %v576 = vadd.f32 %v575, %v464
        %v577 = vadd.f32 %v576, %v467
        %v578 = vadd.f32 %v577, %v472
        %v579 = vadd.f32 %v578, %v475
        %v580 = vadd.f32 %v579, %v480
        %v581 = vadd.f32 %v580, %v483
        %v582 = vadd.f32 %v566, %v581
        %583 = vst [vmem:[%s263] sm:$0xff] %v582
        %v584 = vld [vmem:[%s270] sm:$0xff]
        %v585 = vmul.f32 %v424, %v424
        %v586 = vmul.f32 %v427, %v427
        %v587 = vmul.f32 %v432, %v432
        %v588 = vmul.f32 %v435, %v435
        %v589 = vmul.f32 %v440, %v440
        %v590 = vmul.f32 %v443, %v443
        %v591 = vmul.f32 %v448, %v448
        %v592 = vmul.f32 %v451, %v451
        %v593 = vmul.f32 %v456, %v456
        %v594 = vmul.f32 %v459, %v459
        %v595 = vmul.f32 %v464, %v464
        %v596 = vmul.f32 %v467, %v467
        %v597 = vmul.f32 %v472, %v472
        %v598 = vmul.f32 %v475, %v475
        %v599 = vmul.f32 %v480, %v480
        %v600 = vmul.f32 %v483, %v483
        %v601 = vadd.f32 %v585, %v586
        %v602 = vadd.f32 %v601, %v587
        %v603 = vadd.f32 %v602, %v588
        %v604 = vadd.f32 %v603, %v589
        %v605 = vadd.f32 %v604, %v590
        %v606 = vadd.f32 %v605, %v591
        %v607 = vadd.f32 %v606, %v592
        %v608 = vadd.f32 %v607, %v593
        %v609 = vadd.f32 %v608, %v594
        %v610 = vadd.f32 %v609, %v595
        %v611 = vadd.f32 %v610, %v596
        %v612 = vadd.f32 %v611, %v597
        %v613 = vadd.f32 %v612, %v598
        %v614 = vadd.f32 %v613, %v599
        %v615 = vadd.f32 %v614, %v600
        %v616 = vadd.f32 %v584, %v615
        %617 = vst [vmem:[%s270] sm:$0xff] %v616
        %s618 = sand.u32 %s101, 1
        %s619 = scalar_lea.sflag [#allocation4], %s618
        %s620 = sand.u32 %s101, 1
        %s621 = smul.addr %s620, 64
        %s622 = scalar_lea.vmem [#allocation7], %s621
        %s623 = sand.u32 %s26, 1
        %s624 = scalar_lea.sflag [#allocation9], %s623
        %s625 = sand.u32 %s127, 1
        %s626 = smul.addr %s625, 8
        %s627 = scalar_lea.vmem [#allocation8], %s626
        %s628 = sand.u32 %s26, 1
        %s629 = scalar_lea.sflag [#allocation9], %s628
        %s630 = sand.u32 %s153, 1
        %s631 = smul.addr %s630, 8
        %s632 = scalar_lea.vmem [#allocation10], %s631
        // Predicated region
        $region41: #{tpu_custom_call.1} parent=27 // pred_check
          %p633 = pneg %p111
        $region42: #{tpu_custom_call.1} parent=27 // pred_check_branch
          %635 = sbr.rel (%p633) target = $region44
        $region43: #{tpu_custom_call.1} parent=27 // pred_region
          %s636 = smul.u32 %s30, 2
          %s637 = sadd.s32 %s636, %s31
          %s638 = smul.u32 16, %s637
          %s640 = ssub.s32 1024, 1024
          %641 = vsyncadd %s619, %s640
          %s642 = smul.addr %s638, 64
          %s643 = scalar_lea.hbm %s2, %s642
          %s644 = sshll.u32 %s622, 4
          %s645 = int_to_ptr.vmem [resolvable:$true] %s644
          %650 = dma.vmem_to_hbm [thread:$0]  %s645, 1024, %s643, %s619, 64, 64, 4
        $region44: #{tpu_custom_call.1} parent=27 // pred_fallthru
          _
        // Predicated region
        $region45: #{tpu_custom_call.1} parent=27 // pred_check
          %p651 = pneg %p137
        $region46: #{tpu_custom_call.1} parent=27 // pred_check_branch
          %653 = sbr.rel (%p651) target = $region48
        $region47: #{tpu_custom_call.1} parent=27 // pred_region
          %s655 = ssub.s32 128, 128
          %656 = vsyncadd %s624, %s655
          %s657 = smul.addr %s30, 128
          %s658 = scalar_lea.hbm %s3, %s657
          %s660 = sshll.u32 %s627, 4
          %s661 = int_to_ptr.vmem [resolvable:$true] %s660
          %663 = dma.vmem_to_hbm [thread:$0]  %s661, 128, %s658, %s624
        $region48: #{tpu_custom_call.1} parent=27 // pred_fallthru
          _
        // Predicated region
        $region49: #{tpu_custom_call.1} parent=27 // pred_check
          %p664 = pneg %p163
        $region50: #{tpu_custom_call.1} parent=27 // pred_check_branch
          %666 = sbr.rel (%p664) target = $region52
        $region51: #{tpu_custom_call.1} parent=27 // pred_region
          %s668 = ssub.s32 128, 128
          %669 = vsyncadd %s629, %s668
          %s670 = smul.addr %s30, 128
          %s671 = scalar_lea.hbm %s4, %s670
          %s673 = sshll.u32 %s632, 4
          %s674 = int_to_ptr.vmem [resolvable:$true] %s673
          %676 = dma.vmem_to_hbm [thread:$0]  %s674, 128, %s671, %s629
        $region52: #{tpu_custom_call.1} parent=27 // pred_fallthru
          _
      $region28: #{tpu_custom_call.1} parent=5 // pred_fallthru
        _
      %p677 = scmp.le.s32.totalorder 2, %s21
      // Predicated region
      $region53: #{tpu_custom_call.1} parent=5 // pred_check
        %p678 = pneg %p677
      $region54: #{tpu_custom_call.1} parent=5 // pred_check_branch
        %680 = sbr.rel (%p678) target = $region56
      $region55: #{tpu_custom_call.1} parent=5 // pred_region
        %s681 = ssub.s32 %s21, 2
        // Predicated region
        $region57: #{tpu_custom_call.1} parent=55 // pred_check
          %p682 = pneg %p117
        $region58: #{tpu_custom_call.1} parent=55 // pred_check_branch
          %684 = sbr.rel (%p682) target = $region60
        $region59: #{tpu_custom_call.1} parent=55 // pred_region
          %s685 = sand.u32 %s102, 1
          %s686 = scalar_lea.sflag [#allocation4], %s685
          %s687 = sand.u32 %s102, 1
          %s688 = smul.addr %s687, 64
          %s689 = scalar_lea.vmem [#allocation7], %s688
          %690 = dma.done %s686, 1024
        $region60: #{tpu_custom_call.1} parent=55 // pred_fallthru
          _
        // Predicated region
        $region61: #{tpu_custom_call.1} parent=55 // pred_check
          %p691 = pneg %p143
        $region62: #{tpu_custom_call.1} parent=55 // pred_check_branch
          %693 = sbr.rel (%p691) target = $region64
        $region63: #{tpu_custom_call.1} parent=55 // pred_region
          %s694 = sand.u32 %s27, 1
          %s695 = scalar_lea.sflag [#allocation9], %s694
          %s696 = sand.u32 %s128, 1
          %s697 = smul.addr %s696, 8
          %s698 = scalar_lea.vmem [#allocation8], %s697
          %699 = dma.done %s695, 128
        $region64: #{tpu_custom_call.1} parent=55 // pred_fallthru
          _
        // Predicated region
        $region65: #{tpu_custom_call.1} parent=55 // pred_check
          %p700 = pneg %p169
        $region66: #{tpu_custom_call.1} parent=55 // pred_check_branch
          %702 = sbr.rel (%p700) target = $region68
        $region67: #{tpu_custom_call.1} parent=55 // pred_region
          %s703 = sand.u32 %s27, 1
          %s704 = scalar_lea.sflag [#allocation9], %s703
          %s705 = sand.u32 %s154, 1
          %s706 = smul.addr %s705, 8
          %s707 = scalar_lea.vmem [#allocation10], %s706
          %708 = dma.done %s704, 128
        $region68: #{tpu_custom_call.1} parent=55 // pred_fallthru
          _
      $region56: #{tpu_custom_call.1} parent=5 // pred_fallthru
        _
    $region6: #{tpu_custom_call.1} parent=1 // loop_footer
      %s25 = sadd.s32 1, %s21
    $region7: #{tpu_custom_call.1} parent=1 // loop_footer_branch
      %20 = sbr.rel target = $region3
    $region8: #{tpu_custom_call.1} parent=1 // loop_exit
      _
    %709 = vsyncpa [#allocation3], 1
    %s710 = scalar_lea.sflag [#allocation3], 1
    %711 = vsyncpa %s710, 1
    %712 = vsyncpa [#allocation6], 1
    %713 = vsyncpa [#allocation4], 1
    %s714 = scalar_lea.sflag [#allocation4], 1
    %715 = vsyncpa %s714, 1
    %716 = vsyncpa [#allocation9], 1
    %s717 = scalar_lea.sflag [#allocation9], 1
    %718 = vsyncpa %s717, 1

</llo_original>
